<compile_context>
chip_gen: v7x
topology: tpu7x:2x2x1
jax: 0.10.0
libtpu: 0.0.40
codegen_flags: <defaults>
</compile_context>

<pallas_src>
import jax
import jax.numpy as jnp
import numpy as np
from jax.experimental import pallas as pl
from jax.experimental.pallas import tpu as pltpu

INPUT_CHANNELS = 1
LANE = 128     # vreg lane width
SUBLANE = 8    # f32 sublane depth


def _round_up(v, m):
    return ((v + m - 1) // m) * m


# ----------------------------------------------------------------------------
# Kernel
# ----------------------------------------------------------------------------
def gnn_kernel(
    adj_ref, x_col_ref, x_row_ref, pool_ref,
    w1r_ref, w1s_ref, b1_ref,
    w2cat_ref, b2_ref,
    w3cat_ref, b3_ref,
    wl_ref, bl_ref,
    out_ref,
):
    f32 = jnp.float32
    adj = adj_ref[...]

    # ---- conv1 + relu (no MXU: K=1 shapes waste >99% of the MXU) -----------
    #   agg1[i, 0] = sum_j adj[i, j] * x[j]        -> elementwise + lane reduce
    #   h1 = agg1 * w1_rel + x * w1_root + b1      -> broadcast mul/add (VPU)
    agg1 = jnp.sum(adj.astype(f32) * x_row_ref[...], axis=-1, keepdims=True)
    h = agg1 * w1r_ref[...] + x_col_ref[...] * w1s_ref[...] + b1_ref[...]
    h = jnp.maximum(h, 0.0)

    # ---- conv2 + relu (fused rel/root: one (N, 2H) @ (2H, H) matmul) -------
    agg = jnp.dot(adj, h.astype(adj.dtype), preferred_element_type=f32)
    hcat = jnp.concatenate([agg, h], axis=-1)
    h = jnp.dot(hcat, w2cat_ref[...], preferred_element_type=f32) + b2_ref[...]
    h = jnp.maximum(h, 0.0)

    # ---- conv3 (no relu) ----------------------------------------------------
    agg = jnp.dot(adj, h.astype(adj.dtype), preferred_element_type=f32)
    hcat = jnp.concatenate([agg, h], axis=-1)
    h = jnp.dot(hcat, w3cat_ref[...], preferred_element_type=f32) + b3_ref[...]

    # ---- global mean pool, dropout (eval-mode identity), final linear ------
    pooled = jnp.dot(pool_ref[...].astype(f32), h, preferred_element_type=f32)
    out_ref[...] = (
        jnp.dot(pooled, wl_ref[...], preferred_element_type=f32) + bl_ref[...]
    )


# ----------------------------------------------------------------------------
# Parameters / graph preprocessing (plain JAX, wrapper side)
# ----------------------------------------------------------------------------
def init_params(key, hidden_channels, num_classes):
    ks = jax.random.split(key, 8)
    scale = 0.1

    def lin(k, cin, cout):
        # stored already transposed: (in, out)
        return scale * jax.random.normal(k, (cin, cout), jnp.float32)

    return dict(
        w1_rel=lin(ks[0], INPUT_CHANNELS, hidden_channels),
        b1=scale * jax.random.normal(ks[1], (1, hidden_channels), jnp.float32),
        w1_root=lin(ks[2], INPUT_CHANNELS, hidden_channels),
        w2_rel=lin(ks[3], hidden_channels, hidden_channels),
        b2=jnp.zeros((1, hidden_channels), jnp.float32),
        w2_root=lin(ks[4], hidden_channels, hidden_channels),
        w3_rel=lin(ks[5], hidden_channels, hidden_channels),
        b3=jnp.zeros((1, hidden_channels), jnp.float32),
        w3_root=lin(ks[6], hidden_channels, hidden_channels),
        w_lin=lin(ks[7], hidden_channels, num_classes),
        b_lin=jnp.full((1, num_classes), 0.01, jnp.float32),
    )


def build_adjacency(edge_index, edge_weight, num_nodes):
    src = edge_index[0]
    dst = edge_index[1]
    if edge_weight is None:
        edge_weight = jnp.ones((edge_index.shape[1],), jnp.float32)
    adj = jnp.zeros((num_nodes, num_nodes), jnp.float32)
    # message from j (src) aggregated (summed) into i (dst): A[i, j] += w
    return adj.at[dst, src].add(edge_weight)


def build_pool_matrix(batch, num_graphs, num_nodes):
    one_hot = jax.nn.one_hot(batch, num_graphs, dtype=jnp.float32)  # (N, G)
    counts = jnp.maximum(jnp.sum(one_hot, axis=0), 1.0)             # (G,)
    return (one_hot / counts[None, :]).T                            # (G, N)


def _pad2d(a, rows, cols):
    out = jnp.zeros((rows, cols), jnp.float32)
    return out.at[: a.shape[0], : a.shape[1]].set(a.astype(jnp.float32))


# ----------------------------------------------------------------------------
# Forward wrapper
# ----------------------------------------------------------------------------
def gnn_forward(x, edge_index, batch, params, num_graphs, edge_weight=None,
                adj_dtype=jnp.float32):
    n, cin = x.shape
    assert cin == INPUT_CHANNELS == 1, "first-layer VPU path assumes 1 input channel"
    hidden = params["w1_rel"].shape[1]
    num_classes = params["w_lin"].shape[1]

    n_pad = _round_up(n, SUBLANE)
    g_pad = _round_up(num_graphs, SUBLANE)
    h_pad = _round_up(hidden, LANE)
    c_pad = _round_up(num_classes, LANE)

    adj = build_adjacency(edge_index, edge_weight, n)       # (N, N)
    pool = build_pool_matrix(batch, num_graphs, n)          # (G, N)

    # lane/sublane-dense, zero-padded operands (padding is mathematically inert:
    # padded nodes/graphs/channels never contribute to the real outputs)
    adj_p = _pad2d(adj, n_pad, n_pad).astype(adj_dtype)
    pool_p = _pad2d(pool, g_pad, n_pad)
    x_col = _pad2d(x, n_pad, 1)          # (N, 1) nodes on sublanes
    x_row = _pad2d(x.T, 1, n_pad)        # (1, N) nodes on lanes (for adj*x reduce)

    w1r = _pad2d(params["w1_rel"], 1, h_pad)
    w1s = _pad2d(params["w1_root"], 1, h_pad)
    b1 = _pad2d(params["b1"], 1, h_pad)

    # pre-stacked weights: [agg | h] @ [[w_rel], [w_root]]
    w2cat = jnp.concatenate(
        [_pad2d(params["w2_rel"], h_pad, h_pad),
         _pad2d(params["w2_root"], h_pad, h_pad)], axis=0)          # (2H, H)
    b2 = _pad2d(params["b2"], 1, h_pad)
    w3cat = jnp.concatenate(
        [_pad2d(params["w3_rel"], h_pad, h_pad),
         _pad2d(params["w3_root"], h_pad, h_pad)], axis=0)          # (2H, H)
    b3 = _pad2d(params["b3"], 1, h_pad)

    wl = _pad2d(params["w_lin"], h_pad, c_pad)
    bl = _pad2d(params["b_lin"], 1, c_pad)

    args = (adj_p, x_col, x_row, pool_p,
            w1r, w1s, b1, w2cat, b2, w3cat, b3, wl, bl)

    vmem = pl.BlockSpec(memory_space=pltpu.MemorySpace.VMEM)
    out_padded = pl.pallas_call(
        gnn_kernel,
        out_shape=jax.ShapeDtypeStruct((g_pad, c_pad), jnp.float32),
        in_specs=[vmem] * len(args),
        out_specs=vmem,
    )(*args)

    return out_padded[:num_graphs, :num_classes]


# ----------------------------------------------------------------------------
# Pure-JAX reference (PyG GraphConv semantics)
# ----------------------------------------------------------------------------
def gnn_reference(x, edge_index, batch, params, num_graphs, edge_weight=None):
    n = x.shape[0]
    adj = build_adjacency(edge_index, edge_weight, n)
    pool = build_pool_matrix(batch, num_graphs, n)

    def conv(h, w_rel, b, w_root):
        return (adj @ h) @ w_rel + b + h @ w_root

    h = jax.nn.relu(conv(x, params["w1_rel"], params["b1"], params["w1_root"]))
    h = jax.nn.relu(conv(h, params["w2_rel"], params["b2"], params["w2_root"]))
    h = conv(h, params["w3_rel"], params["b3"], params["w3_root"])
    pooled = pool @ h
    return pooled @ params["w_lin"] + params["b_lin"]


if __name__ == "__main__":
    key = jax.random.PRNGKey(0)

    num_nodes = 16
    num_graphs = 2
    hidden_channels = 32
    num_classes = 3

    # deterministic node features (N, 1)
    kx, kp = jax.random.split(key)
    x = jax.random.normal(kx, (num_nodes, INPUT_CHANNELS), jnp.float32)

    # deterministic edge_index: ring within each graph of 8 nodes (both dirs)
    src_list, dst_list = [], []
    for g in range(num_graphs):
        base = g * 8
        for i in range(8):
            a, b = base + i, base + (i + 1) % 8
            src_list += [a, b]
            dst_list += [b, a]
    edge_index = jnp.array([src_list, dst_list], dtype=jnp.int32)  # (2, E)

    # batch vector: first 8 nodes -> graph 0, last 8 -> graph 1
    batch = jnp.array([0] * 8 + [1] * 8, dtype=jnp.int32)

    params = init_params(kp, hidden_channels, num_classes)

    out = gnn_forward(x, edge_index, batch, params, num_graphs, edge_weight=None)
    out = jax.block_until_ready(out)

    ref = gnn_reference(x, edge_index, batch, params, num_graphs, edge_weight=None)
    np.testing.assert_allclose(np.asarray(out), np.asarray(ref), rtol=1e-4, atol=1e-4)

    print("KERNEL_OK")
</pallas_src>

<mosaic_0001>
module attributes {stable_mosaic.version = 11 : i64} {
  func.func @gnn_kernel(%arg0: memref<16x16xf32, #tpu.memory_space<vmem>>, %arg1: memref<16x1xf32, #tpu.memory_space<vmem>>, %arg2: memref<1x16xf32, #tpu.memory_space<vmem>>, %arg3: memref<8x16xf32, #tpu.memory_space<vmem>>, %arg4: memref<1x128xf32, #tpu.memory_space<vmem>>, %arg5: memref<1x128xf32, #tpu.memory_space<vmem>>, %arg6: memref<1x128xf32, #tpu.memory_space<vmem>>, %arg7: memref<256x128xf32, #tpu.memory_space<vmem>>, %arg8: memref<1x128xf32, #tpu.memory_space<vmem>>, %arg9: memref<256x128xf32, #tpu.memory_space<vmem>>, %arg10: memref<1x128xf32, #tpu.memory_space<vmem>>, %arg11: memref<128x128xf32, #tpu.memory_space<vmem>>, %arg12: memref<1x128xf32, #tpu.memory_space<vmem>>, %arg13: memref<8x128xf32, #tpu.memory_space<vmem>>) attributes {dimension_semantics = [], scalar_prefetch = 0 : i64, scratch_operands = 0 : i64, tpu.core_type = #tpu.core_type<tc>} {
    %c0 = arith.constant 0 : index
    %c0_0 = arith.constant 0 : index
    %0 = vector.load %arg0[%c0, %c0_0] : memref<16x16xf32, #tpu.memory_space<vmem>>, vector<16x16xf32>
    %c0_1 = arith.constant 0 : index
    %c0_2 = arith.constant 0 : index
    %1 = vector.load %arg2[%c0_1, %c0_2] : memref<1x16xf32, #tpu.memory_space<vmem>>, vector<1x16xf32>
    %2 = vector.broadcast %1 : vector<1x16xf32> to vector<16x16xf32>
    %3 = arith.mulf %0, %2 : vector<16x16xf32>
    %cst = arith.constant dense<0.000000e+00> : vector<16xf32>
    %4 = vector.multi_reduction <add>, %3, %cst [1] : vector<16x16xf32> to vector<16xf32>
    %5 = vector.shape_cast %4 : vector<16xf32> to vector<16x1xf32>
    %c0_3 = arith.constant 0 : index
    %c0_4 = arith.constant 0 : index
    %6 = vector.load %arg4[%c0_3, %c0_4] : memref<1x128xf32, #tpu.memory_space<vmem>>, vector<1x128xf32>
    %7 = vector.broadcast %5 : vector<16x1xf32> to vector<16x128xf32>
    %8 = vector.broadcast %6 : vector<1x128xf32> to vector<16x128xf32>
    %9 = arith.mulf %7, %8 : vector<16x128xf32>
    %c0_5 = arith.constant 0 : index
    %c0_6 = arith.constant 0 : index
    %10 = vector.load %arg1[%c0_5, %c0_6] : memref<16x1xf32, #tpu.memory_space<vmem>>, vector<16x1xf32>
    %c0_7 = arith.constant 0 : index
    %c0_8 = arith.constant 0 : index
    %11 = vector.load %arg5[%c0_7, %c0_8] : memref<1x128xf32, #tpu.memory_space<vmem>>, vector<1x128xf32>
    %12 = vector.broadcast %10 : vector<16x1xf32> to vector<16x128xf32>
    %13 = vector.broadcast %11 : vector<1x128xf32> to vector<16x128xf32>
    %14 = arith.mulf %12, %13 : vector<16x128xf32>
    %15 = arith.addf %9, %14 : vector<16x128xf32>
    %c0_9 = arith.constant 0 : index
    %c0_10 = arith.constant 0 : index
    %16 = vector.load %arg6[%c0_9, %c0_10] : memref<1x128xf32, #tpu.memory_space<vmem>>, vector<1x128xf32>
    %17 = vector.broadcast %16 : vector<1x128xf32> to vector<16x128xf32>
    %18 = arith.addf %15, %17 : vector<16x128xf32>
    %cst_11 = arith.constant 0.000000e+00 : f32
    %19 = vector.broadcast %cst_11 : f32 to vector<16x128xf32>
    %20 = arith.maximumf %18, %19 : vector<16x128xf32>
    %cst_12 = arith.constant dense<0.000000e+00> : vector<16x128xf32>
    %21 = tpu.matmul %0, %20, %cst_12 {dimension_numbers = #tpu.dot_dimension_numbers<[1], [0], [0], [1], [0, 0, 1, 1], [], []>} : vector<16x16xf32>, vector<16x128xf32>, vector<16x128xf32> -> vector<16x128xf32>
    %22 = tpu.concatenate %21, %20 in 1 : vector<16x128xf32>, vector<16x128xf32> -> vector<16x256xf32>
    %c0_13 = arith.constant 0 : index
    %c0_14 = arith.constant 0 : index
    %23 = vector.load %arg7[%c0_13, %c0_14] : memref<256x128xf32, #tpu.memory_space<vmem>>, vector<256x128xf32>
    %cst_15 = arith.constant dense<0.000000e+00> : vector<16x128xf32>
    %24 = tpu.matmul %22, %23, %cst_15 {dimension_numbers = #tpu.dot_dimension_numbers<[1], [0], [0], [1], [0, 0, 1, 1], [], []>} : vector<16x256xf32>, vector<256x128xf32>, vector<16x128xf32> -> vector<16x128xf32>
    %c0_16 = arith.constant 0 : index
    %c0_17 = arith.constant 0 : index
    %25 = vector.load %arg8[%c0_16, %c0_17] : memref<1x128xf32, #tpu.memory_space<vmem>>, vector<1x128xf32>
    %26 = vector.broadcast %25 : vector<1x128xf32> to vector<16x128xf32>
    %27 = arith.addf %24, %26 : vector<16x128xf32>
    %cst_18 = arith.constant 0.000000e+00 : f32
    %28 = vector.broadcast %cst_18 : f32 to vector<16x128xf32>
    %29 = arith.maximumf %27, %28 : vector<16x128xf32>
    %cst_19 = arith.constant dense<0.000000e+00> : vector<16x128xf32>
    %30 = tpu.matmul %0, %29, %cst_19 {dimension_numbers = #tpu.dot_dimension_numbers<[1], [0], [0], [1], [0, 0, 1, 1], [], []>} : vector<16x16xf32>, vector<16x128xf32>, vector<16x128xf32> -> vector<16x128xf32>
    %31 = tpu.concatenate %30, %29 in 1 : vector<16x128xf32>, vector<16x128xf32> -> vector<16x256xf32>
    %c0_20 = arith.constant 0 : index
    %c0_21 = arith.constant 0 : index
    %32 = vector.load %arg9[%c0_20, %c0_21] : memref<256x128xf32, #tpu.memory_space<vmem>>, vector<256x128xf32>
    %cst_22 = arith.constant dense<0.000000e+00> : vector<16x128xf32>
    %33 = tpu.matmul %31, %32, %cst_22 {dimension_numbers = #tpu.dot_dimension_numbers<[1], [0], [0], [1], [0, 0, 1, 1], [], []>} : vector<16x256xf32>, vector<256x128xf32>, vector<16x128xf32> -> vector<16x128xf32>
    %c0_23 = arith.constant 0 : index
    %c0_24 = arith.constant 0 : index
    %34 = vector.load %arg10[%c0_23, %c0_24] : memref<1x128xf32, #tpu.memory_space<vmem>>, vector<1x128xf32>
    %35 = vector.broadcast %34 : vector<1x128xf32> to vector<16x128xf32>
    %36 = arith.addf %33, %35 : vector<16x128xf32>
    %c0_25 = arith.constant 0 : index
    %c0_26 = arith.constant 0 : index
    %37 = vector.load %arg3[%c0_25, %c0_26] : memref<8x16xf32, #tpu.memory_space<vmem>>, vector<8x16xf32>
    %cst_27 = arith.constant dense<0.000000e+00> : vector<8x128xf32>
    %38 = tpu.matmul %37, %36, %cst_27 {dimension_numbers = #tpu.dot_dimension_numbers<[1], [0], [0], [1], [0, 0, 1, 1], [], []>} : vector<8x16xf32>, vector<16x128xf32>, vector<8x128xf32> -> vector<8x128xf32>
    %c0_28 = arith.constant 0 : index
    %c0_29 = arith.constant 0 : index
    %39 = vector.load %arg11[%c0_28, %c0_29] : memref<128x128xf32, #tpu.memory_space<vmem>>, vector<128x128xf32>
    %cst_30 = arith.constant dense<0.000000e+00> : vector<8x128xf32>
    %40 = tpu.matmul %38, %39, %cst_30 {dimension_numbers = #tpu.dot_dimension_numbers<[1], [0], [0], [1], [0, 0, 1, 1], [], []>} : vector<8x128xf32>, vector<128x128xf32>, vector<8x128xf32> -> vector<8x128xf32>
    %c0_31 = arith.constant 0 : index
    %c0_32 = arith.constant 0 : index
    %41 = vector.load %arg12[%c0_31, %c0_32] : memref<1x128xf32, #tpu.memory_space<vmem>>, vector<1x128xf32>
    %42 = vector.broadcast %41 : vector<1x128xf32> to vector<8x128xf32>
    %43 = arith.addf %40, %42 : vector<8x128xf32>
    %c0_33 = arith.constant 0 : index
    %c0_34 = arith.constant 0 : index
    %44 = vector.load %arg13[%c0_33, %c0_34] : memref<8x128xf32, #tpu.memory_space<vmem>>, vector<8x128xf32>
    tpu.vector_store %arg13[%c0_33, %c0_34], %43 {strides = array<i32>} : memref<8x128xf32, #tpu.memory_space<vmem>>, vector<8x128xf32>,
    return
  }
}

</mosaic_0001>

<llo_original>
// kernel: tpu_custom_call.1
$region0: #{tpu_custom_call.1}
  #allocation0 [shape = 'u32[]', space=smem, size = 0x4, offset = 0x4, fixed_abs, tag = 'smem constant byte address 0x4 - core index']
  #allocation1 [shape = 'u32[144,128]{1,0:T(1,128)}', space=vmem, size = 0x12000, scoped, tag = 'internal scratch']
  %s0 = inlined_call_operand.vmem [shape: f32[16,16], index: 0, kind: input, shape index: {}]
  %s1 = inlined_call_operand.vmem [shape: f32[16,1], index: 1, kind: input, shape index: {}]
  %s2 = inlined_call_operand.hbm [shape: f32[1,16], index: 2, kind: input, shape index: {}]
  %s3 = inlined_call_operand.vmem [shape: f32[8,16], index: 3, kind: input, shape index: {}]
  %s4 = inlined_call_operand.vmem [shape: f32[1,128], index: 4, kind: input, shape index: {}]
  %s5 = inlined_call_operand.vmem [shape: f32[1,128], index: 5, kind: input, shape index: {}]
  %s6 = inlined_call_operand.vmem [shape: f32[1,128], index: 6, kind: input, shape index: {}]
  %s7 = inlined_call_operand.hbm [shape: f32[256,128], index: 7, kind: input, shape index: {}]
  %s8 = inlined_call_operand.vmem [shape: f32[1,128], index: 8, kind: input, shape index: {}]
  %s9 = inlined_call_operand.hbm [shape: f32[256,128], index: 9, kind: input, shape index: {}]
  %s10 = inlined_call_operand.vmem [shape: f32[1,128], index: 10, kind: input, shape index: {}]
  %s11 = inlined_call_operand.hbm [shape: f32[128,128], index: 11, kind: input, shape index: {}]
  %s12 = inlined_call_operand.vmem [shape: f32[1,128], index: 12, kind: input, shape index: {}]
  %s13 = inlined_call_operand.hbm [shape: f32[8,128], index: 13, kind: output, shape index: {}]
  %s14 = sld [smem:[#allocation0]]
  $region78: #{tpu_custom_call.1} parent=0
    _
  %s16 = ssub.s32 1, %s14
  %s17 = scalar_select 0, %s16, %s14
  $region1: #{tpu_custom_call.1} parent=0
    #allocation2 [shape = 'u8[512]{0}', space=vmem, size = 0x400, scoped, tag = 'input window, operand 2, single buffered']
    #allocation3 [shape = 's32[1]{0}', space=sflag, size = 0x4, scoped, tag = 'scoped memory for tpu_custom_call.1']
    #allocation4 [shape = 's32[1]{0}', space=sflag, size = 0x4, scoped, tag = 'scoped memory for tpu_custom_call.1']
    #allocation5 [shape = 'u8[131072]{0}', space=vmem, size = 0x20000, scoped, tag = 'input window, operand 7, single buffered']
    #allocation6 [shape = 's32[1]{0}', space=sflag, size = 0x4, scoped, tag = 'scoped memory for tpu_custom_call.1']
    #allocation7 [shape = 'u8[131072]{0}', space=vmem, size = 0x20000, scoped, tag = 'input window, operand 9, single buffered']
    #allocation8 [shape = 'u8[65536]{0}', space=vmem, size = 0x10000, scoped, tag = 'input window, operand 11, single buffered']
    #allocation9 [shape = 's32[1]{0}', space=sflag, size = 0x4, scoped, tag = 'scoped memory for tpu_custom_call.1']
    #allocation10 [shape = 'u8[4096]{0}', space=vmem, size = 0x1000, scoped, tag = 'output window, operand 0, single buffered']
    %18 = vsyncpa [#allocation3], 0
    %19 = vsyncpa [#allocation6], 0
    %20 = vsyncpa [#allocation9], 0
    %21 = vsyncpa [#allocation4], 0
    // Predicated region
    $region2: #{tpu_custom_call.1} parent=1 // pred_check
      _
    $region3: #{tpu_custom_call.1} parent=1 // pred_check_branch
      %23 = sbr.rel (0) target = $region5
    $region4: #{tpu_custom_call.1} parent=1 // pred_region
      _
    $region5: #{tpu_custom_call.1} parent=1 // pred_fallthru
      _
    // Predicated region
    $region6: #{tpu_custom_call.1} parent=1 // pred_check
      _
    $region7: #{tpu_custom_call.1} parent=1 // pred_check_branch
      %25 = sbr.rel (0) target = $region9
    $region8: #{tpu_custom_call.1} parent=1 // pred_region
      _
    $region9: #{tpu_custom_call.1} parent=1 // pred_fallthru
      _
    // Predicated region
    $region10: #{tpu_custom_call.1} parent=1 // pred_check
      _
    $region11: #{tpu_custom_call.1} parent=1 // pred_check_branch
      %27 = sbr.rel (0) target = $region13
    $region12: #{tpu_custom_call.1} parent=1 // pred_region
      %s29 = ssub.s32 16, 16
      %30 = vsyncadd [#allocation3], %s29
      %s32 = sshll.u32 [#allocation2], 4
      %s33 = int_to_ptr.vmem [resolvable:$true] %s32
      %35 = dma.hbm_to_vmem [thread:$0]  %s2, 16, %s33, [#allocation3]
    $region13: #{tpu_custom_call.1} parent=1 // pred_fallthru
      _
    // Predicated region
    $region14: #{tpu_custom_call.1} parent=1 // pred_check
      _
    $region15: #{tpu_custom_call.1} parent=1 // pred_check_branch
      %37 = sbr.rel (0) target = $region17
    $region16: #{tpu_custom_call.1} parent=1 // pred_region
      _
    $region17: #{tpu_custom_call.1} parent=1 // pred_fallthru
      _
    // Predicated region
    $region18: #{tpu_custom_call.1} parent=1 // pred_check
      _
    $region19: #{tpu_custom_call.1} parent=1 // pred_check_branch
      %39 = sbr.rel (0) target = $region21
    $region20: #{tpu_custom_call.1} parent=1 // pred_region
      _
    $region21: #{tpu_custom_call.1} parent=1 // pred_fallthru
      _
    // Predicated region
    $region22: #{tpu_custom_call.1} parent=1 // pred_check
      _
    $region23: #{tpu_custom_call.1} parent=1 // pred_check_branch
      %41 = sbr.rel (0) target = $region25
    $region24: #{tpu_custom_call.1} parent=1 // pred_region
      _
    $region25: #{tpu_custom_call.1} parent=1 // pred_fallthru
      _
    // Predicated region
    $region26: #{tpu_custom_call.1} parent=1 // pred_check
      _
    $region27: #{tpu_custom_call.1} parent=1 // pred_check_branch
      %43 = sbr.rel (0) target = $region29
    $region28: #{tpu_custom_call.1} parent=1 // pred_region
      _
    $region29: #{tpu_custom_call.1} parent=1 // pred_fallthru
      _
    // Predicated region
    $region30: #{tpu_custom_call.1} parent=1 // pred_check
      _
    $region31: #{tpu_custom_call.1} parent=1 // pred_check_branch
      %45 = sbr.rel (0) target = $region33
    $region32: #{tpu_custom_call.1} parent=1 // pred_region
      %s47 = ssub.s32 4096, 4096
      %48 = vsyncadd [#allocation6], %s47
      %s49 = sshll.u32 [#allocation5], 4
      %s50 = int_to_ptr.vmem [resolvable:$true] %s49
      %55 = dma.hbm_to_vmem [thread:$0]  %s7, 4096, %s50, [#allocation6], 128, 128, 8
    $region33: #{tpu_custom_call.1} parent=1 // pred_fallthru
      _
    // Predicated region
    $region34: #{tpu_custom_call.1} parent=1 // pred_check
      _
    $region35: #{tpu_custom_call.1} parent=1 // pred_check_branch
      %57 = sbr.rel (0) target = $region37
    $region36: #{tpu_custom_call.1} parent=1 // pred_region
      _
    $region37: #{tpu_custom_call.1} parent=1 // pred_fallthru
      _
    // Predicated region
    $region38: #{tpu_custom_call.1} parent=1 // pred_check
      _
    $region39: #{tpu_custom_call.1} parent=1 // pred_check_branch
      %59 = sbr.rel (0) target = $region41
    $region40: #{tpu_custom_call.1} parent=1 // pred_region
      %s61 = ssub.s32 4096, 4096
      %62 = vsyncadd [#allocation6], %s61
      %s63 = sshll.u32 [#allocation7], 4
      %s64 = int_to_ptr.vmem [resolvable:$true] %s63
      %69 = dma.hbm_to_vmem [thread:$0]  %s9, 4096, %s64, [#allocation6], 128, 128, 8
    $region41: #{tpu_custom_call.1} parent=1 // pred_fallthru
      _
    // Predicated region
    $region42: #{tpu_custom_call.1} parent=1 // pred_check
      _
    $region43: #{tpu_custom_call.1} parent=1 // pred_check_branch
      %71 = sbr.rel (0) target = $region45
    $region44: #{tpu_custom_call.1} parent=1 // pred_region
      _
    $region45: #{tpu_custom_call.1} parent=1 // pred_fallthru
      _
    // Predicated region
    $region46: #{tpu_custom_call.1} parent=1 // pred_check
      _
    $region47: #{tpu_custom_call.1} parent=1 // pred_check_branch
      %73 = sbr.rel (0) target = $region49
    $region48: #{tpu_custom_call.1} parent=1 // pred_region
      %s75 = ssub.s32 2048, 2048
      %76 = vsyncadd [#allocation9], %s75
      %s77 = sshll.u32 [#allocation8], 4
      %s78 = int_to_ptr.vmem [resolvable:$true] %s77
      %83 = dma.hbm_to_vmem [thread:$0]  %s11, 2048, %s78, [#allocation9], 128, 128, 8
    $region49: #{tpu_custom_call.1} parent=1 // pred_fallthru
      _
    // Predicated region
    $region50: #{tpu_custom_call.1} parent=1 // pred_check
      _
    $region51: #{tpu_custom_call.1} parent=1 // pred_check_branch
      %85 = sbr.rel (0) target = $region53
    $region52: #{tpu_custom_call.1} parent=1 // pred_region
      _
    $region53: #{tpu_custom_call.1} parent=1 // pred_fallthru
      _
    // Predicated region
    $region54: #{tpu_custom_call.1} parent=1 // pred_check
      _
    $region55: #{tpu_custom_call.1} parent=1 // pred_check_branch
      %87 = sbr.rel (0) target = $region57
    $region56: #{tpu_custom_call.1} parent=1 // pred_region
      %88 = dma.done [#allocation3], 16
    $region57: #{tpu_custom_call.1} parent=1 // pred_fallthru
      _
    // Predicated region
    $region58: #{tpu_custom_call.1} parent=1 // pred_check
      _
    $region59: #{tpu_custom_call.1} parent=1 // pred_check_branch
      %90 = sbr.rel (0) target = $region61
    $region60: #{tpu_custom_call.1} parent=1 // pred_region
      %91 = dma.done [#allocation6], 4096
    $region61: #{tpu_custom_call.1} parent=1 // pred_fallthru
      _
    // Predicated region
    $region62: #{tpu_custom_call.1} parent=1 // pred_check
      _
    $region63: #{tpu_custom_call.1} parent=1 // pred_check_branch
      %93 = sbr.rel (0) target = $region65
    $region64: #{tpu_custom_call.1} parent=1 // pred_region
      %94 = dma.done [#allocation6], 4096
    $region65: #{tpu_custom_call.1} parent=1 // pred_fallthru
      _
    // Predicated region
    $region66: #{tpu_custom_call.1} parent=1 // pred_check
      _
    $region67: #{tpu_custom_call.1} parent=1 // pred_check_branch
      %96 = sbr.rel (0) target = $region69
    $region68: #{tpu_custom_call.1} parent=1 // pred_region
      %97 = dma.done [#allocation9], 2048
    $region69: #{tpu_custom_call.1} parent=1 // pred_fallthru
      _
    %v98 = vld [vmem:[%s0] sm:$0xff]
    %v99 = vld [vmem:[%s0 + $0x8] sm:$0xff]
    %v100 = vld [vmem:[#allocation2] sm:$0x1]
    %v102 = vlaneseq
    %v103 = vshrl.u32 %v102, 7
    %v104 = vsub.s32 0, %v103
    %v105 = vrot.slane %v100, %v104
    %v107 = vmul.f32 %v98, %v105
    %v108 = vmul.f32 %v99, %v105
    %vm109 = vcmask 130048
    %v110 = vsel %vm109, %v107, 0.0
    %111 = vadd.xlane.f32.xlu0 %v110
    %v112 = vpop.xlane.xlu0 %111
    %v113 = vsel %vm109, %v108, 0.0
    %114 = vadd.xlane.f32.xlu0 %v113
    %v115 = vpop.xlane.xlu0 %114
    %v116 = vld [vmem:[%s4] sm:$0x1]
    %v118 = vlaneseq
    %v119 = vshrl.u32 %v118, 7
    %v120 = vsub.s32 0, %v119
    %v121 = vrot.slane %v116, %v120
    %v123 = vmul.f32 %v112, %v121
    %v124 = vmul.f32 %v115, %v121
    %v125 = vld [vmem:[%s1] sm:$0xff]
    %v126 = vld [vmem:[%s1 + $0x8] sm:$0xff]
    %v127 = vld [vmem:[%s5] sm:$0x1]
    %129 = vset.pattern.permute.xlu0 0
    %130 = vperm.xlu0 %129, %v125
    %v131 = vpop.permute.xlu0 %130
    %134 = vset.pattern.permute.xlu0 0
    %135 = vperm.xlu0 %134, %v126
    %v136 = vpop.permute.xlu0 %135
    %v139 = vlaneseq
    %v140 = vshrl.u32 %v139, 7
    %v141 = vsub.s32 0, %v140
    %v142 = vrot.slane %v127, %v141
    %v144 = vmul.f32 %v131, %v142
    %v145 = vmul.f32 %v136, %v142
    %v146 = vadd.f32 %v123, %v144
    %v147 = vadd.f32 %v124, %v145
    %v148 = vld [vmem:[%s6] sm:$0x1]
    %v150 = vlaneseq
    %v151 = vshrl.u32 %v150, 7
    %v152 = vsub.s32 0, %v151
    %v153 = vrot.slane %v148, %v152
    %v155 = vadd.f32 %v146, %v153
    %v156 = vadd.f32 %v147, %v153
    %v157 = vmax.f32 %v155, 0.0
    %v158 = vmax.f32 %v156, 0.0
    %v160 = vsel %vm109, %v98, 0
    %v163 = vsel %vm109, %v99, 0
    %165 = vmatprep.subr.mxu0 0.0
    %166 = vmatpush1.msra.mxu0 %v157
    %167 = vmatprep.subr.mxu0 0.0
    %168 = vmatpush1.msra.mxu0 %v158
    %169 = vmatprep.subr.mxu0 0.0
    %170 = vmatpush1.msra.mxu0 0.0
    %171 = vmatprep.subr.mxu0 0.0
    %172 = vmatpush1.msra.mxu0 0.0
    %173 = vmatprep.subr.mxu0 0.0
    %174 = vmatpush1.msra.mxu0 0.0
    %175 = vmatprep.subr.mxu0 0.0
    %176 = vmatpush1.msra.mxu0 0.0
    %177 = vmatprep.subr.mxu0 0.0
    %178 = vmatpush1.msra.mxu0 0.0
    %179 = vmatprep.subr.mxu0 0.0
    %180 = vmatpush1.msra.mxu0 0.0
    %181 = vmatprep.subr.mxu0 0.0
    %182 = vmatpush1.msra.mxu0 0.0
    %183 = vmatprep.subr.mxu0 0.0
    %184 = vmatpush1.msra.mxu0 0.0
    %185 = vmatprep.subr.mxu0 0.0
    %186 = vmatpush1.msra.mxu0 0.0
    %187 = vmatprep.subr.mxu0 0.0
    %188 = vmatpush1.msra.mxu0 0.0
    %189 = vmatprep.subr.mxu0 0.0
    %190 = vmatpush1.msra.mxu0 0.0
    %191 = vmatprep.subr.mxu0 0.0
    %192 = vmatpush1.msra.mxu0 0.0
    %193 = vmatprep.subr.mxu0 0.0
    %194 = vmatpush1.msra.mxu0 0.0
    %195 = vmatprep.subr.mxu0 0.0
    %196 = vmatpush1.msra.mxu0 0.0
    %197 = vmatprep.subr.mxu0 0.0
    %198 = vmatpush1.msra.mxu0 0.0
    %199 = vmatprep.subr.mxu0 0.0
    %200 = vmatpush1.msra.mxu0 0.0
    %201 = vmatprep.subr.mxu0 0.0
    %202 = vmatpush1.msra.mxu0 0.0
    %203 = vmatprep.subr.mxu0 0.0
    %204 = vmatpush1.msra.mxu0 0.0
    %205 = vmatprep.subr.mxu0 0.0
    %206 = vmatpush1.msra.mxu0 0.0
    %207 = vmatprep.subr.mxu0 0.0
    %208 = vmatpush1.msra.mxu0 0.0
    %209 = vmatprep.subr.mxu0 0.0
    %210 = vmatpush1.msra.mxu0 0.0
    %211 = vmatprep.subr.mxu0 0.0
    %212 = vmatpush1.msra.mxu0 0.0
    %213 = vmatprep.subr.mxu0 0.0
    %214 = vmatpush1.msra.mxu0 0.0
    %215 = vmatprep.subr.mxu0 0.0
    %216 = vmatpush1.msra.mxu0 0.0
    %217 = vmatprep.subr.mxu0 0.0
    %218 = vmatpush1.msra.mxu0 0.0
    %219 = vmatprep.subr.mxu0 0.0
    %220 = vmatpush1.msra.mxu0 0.0
    %221 = vmatprep.subr.mxu0 0.0
    %222 = vmatpush1.msra.mxu0 0.0
    %223 = vmatprep.subr.mxu0 0.0
    %224 = vmatpush1.msra.mxu0 0.0
    %225 = vmatprep.subr.mxu0 0.0
    %226 = vmatpush1.msra.mxu0 0.0
    %227 = vmatprep.subr.mxu0 0.0
    %228 = vmatpush1.msra.mxu0 0.0
    %229 = vmatprep.mubr.f32.mxu0 0.0
    %230 = vmatmul.mubr.f32.gmra.mrb[0].mxu0 %v160
    %v231 = vpop.f32.mrb[0].mxu0
    %v232 = vadd.f32 0.0, %v231
    %v233 = vpop.f32.mrb[0].mxu0
    %234 = vmatprep.mubr.f32.mxu0 0.0
    %235 = vmatmul.mubr.f32.gmra.mrb[0].mxu0 %v163
    %v236 = vpop.f32.mrb[0].mxu0
    %v237 = vadd.f32 0.0, %v236
    %v238 = vpop.f32.mrb[0].mxu0
    %239 = vdwg.mxu0
    %v240 = vld [vmem:[#allocation5] sm:$0xff]
    %v241 = vld [vmem:[#allocation5 + $0x8] sm:$0xff]
    %v242 = vld [vmem:[#allocation5 + $0x10] sm:$0xff]
    %v243 = vld [vmem:[#allocation5 + $0x18] sm:$0xff]
    %v244 = vld [vmem:[#allocation5 + $0x20] sm:$0xff]
    %v245 = vld [vmem:[#allocation5 + $0x28] sm:$0xff]
    %v246 = vld [vmem:[#allocation5 + $0x30] sm:$0xff]
    %v247 = vld [vmem:[#allocation5 + $0x38] sm:$0xff]
    %v248 = vld [vmem:[#allocation5 + $0x40] sm:$0xff]
    %v249 = vld [vmem:[#allocation5 + $0x48] sm:$0xff]
    %v250 = vld [vmem:[#allocation5 + $0x50] sm:$0xff]
    %v251 = vld [vmem:[#allocation5 + $0x58] sm:$0xff]
    %v252 = vld [vmem:[#allocation5 + $0x60] sm:$0xff]
    %v253 = vld [vmem:[#allocation5 + $0x68] sm:$0xff]
    %v254 = vld [vmem:[#allocation5 + $0x70] sm:$0xff]
    %v255 = vld [vmem:[#allocation5 + $0x78] sm:$0xff]
    %v256 = vld [vmem:[#allocation5 + $0x80] sm:$0xff]
    %v257 = vld [vmem:[#allocation5 + $0x88] sm:$0xff]
    %v258 = vld [vmem:[#allocation5 + $0x90] sm:$0xff]
    %v259 = vld [vmem:[#allocation5 + $0x98] sm:$0xff]
    %v260 = vld [vmem:[#allocation5 + $0xa0] sm:$0xff]
    %v261 = vld [vmem:[#allocation5 + $0xa8] sm:$0xff]
    %v262 = vld [vmem:[#allocation5 + $0xb0] sm:$0xff]
    %v263 = vld [vmem:[#allocation5 + $0xb8] sm:$0xff]
    %v264 = vld [vmem:[#allocation5 + $0xc0] sm:$0xff]
    %v265 = vld [vmem:[#allocation5 + $0xc8] sm:$0xff]
    %v266 = vld [vmem:[#allocation5 + $0xd0] sm:$0xff]
    %v267 = vld [vmem:[#allocation5 + $0xd8] sm:$0xff]
    %v268 = vld [vmem:[#allocation5 + $0xe0] sm:$0xff]
    %v269 = vld [vmem:[#allocation5 + $0xe8] sm:$0xff]
    %v270 = vld [vmem:[#allocation5 + $0xf0] sm:$0xff]
    %v271 = vld [vmem:[#allocation5 + $0xf8] sm:$0xff]
    %v272 = vld [vmem:[%s8] sm:$0x1]
    %v274 = vlaneseq
    %v275 = vshrl.u32 %v274, 7
    %v276 = vsub.s32 0, %v275
    %v277 = vrot.slane %v272, %v276
    %279 = vmatprep.subr.mxu0 0.0
    %280 = vmatpush1.msra.mxu0 %v240
    %281 = vmatprep.subr.mxu0 0.0
    %282 = vmatpush1.msra.mxu0 %v241
    %283 = vmatprep.subr.mxu0 0.0
    %284 = vmatpush1.msra.mxu0 %v242
    %285 = vmatprep.subr.mxu0 0.0
    %286 = vmatpush1.msra.mxu0 %v243
    %287 = vmatprep.subr.mxu0 0.0
    %288 = vmatpush1.msra.mxu0 %v244
    %289 = vmatprep.subr.mxu0 0.0
    %290 = vmatpush1.msra.mxu0 %v245
    %291 = vmatprep.subr.mxu0 0.0
    %292 = vmatpush1.msra.mxu0 %v246
    %293 = vmatprep.subr.mxu0 0.0
    %294 = vmatpush1.msra.mxu0 %v247
    %295 = vmatprep.subr.mxu0 0.0
    %296 = vmatpush1.msra.mxu0 %v248
    %297 = vmatprep.subr.mxu0 0.0
    %298 = vmatpush1.msra.mxu0 %v249
    %299 = vmatprep.subr.mxu0 0.0
    %300 = vmatpush1.msra.mxu0 %v250
    %301 = vmatprep.subr.mxu0 0.0
    %302 = vmatpush1.msra.mxu0 %v251
    %303 = vmatprep.subr.mxu0 0.0
    %304 = vmatpush1.msra.mxu0 %v252
    %305 = vmatprep.subr.mxu0 0.0
    %306 = vmatpush1.msra.mxu0 %v253
    %307 = vmatprep.subr.mxu0 0.0
    %308 = vmatpush1.msra.mxu0 %v254
    %309 = vmatprep.subr.mxu0 0.0
    %310 = vmatpush1.msra.mxu0 %v255
    %311 = vmatprep.subr.mxu0 0.0
    %312 = vmatpush1.msra.mxu0 %v256
    %313 = vmatprep.subr.mxu0 0.0
    %314 = vmatpush1.msra.mxu0 %v257
    %315 = vmatprep.subr.mxu0 0.0
    %316 = vmatpush1.msra.mxu0 %v258
    %317 = vmatprep.subr.mxu0 0.0
    %318 = vmatpush1.msra.mxu0 %v259
    %319 = vmatprep.subr.mxu0 0.0
    %320 = vmatpush1.msra.mxu0 %v260
    %321 = vmatprep.subr.mxu0 0.0
    %322 = vmatpush1.msra.mxu0 %v261
    %323 = vmatprep.subr.mxu0 0.0
    %324 = vmatpush1.msra.mxu0 %v262
    %325 = vmatprep.subr.mxu0 0.0
    %326 = vmatpush1.msra.mxu0 %v263
    %327 = vmatprep.subr.mxu0 0.0
    %328 = vmatpush1.msra.mxu0 %v264
    %329 = vmatprep.subr.mxu0 0.0
    %330 = vmatpush1.msra.mxu0 %v265
    %331 = vmatprep.subr.mxu0 0.0
    %332 = vmatpush1.msra.mxu0 %v266
    %333 = vmatprep.subr.mxu0 0.0
    %334 = vmatpush1.msra.mxu0 %v267
    %335 = vmatprep.subr.mxu0 0.0
    %336 = vmatpush1.msra.mxu0 %v268
    %337 = vmatprep.subr.mxu0 0.0
    %338 = vmatpush1.msra.mxu0 %v269
    %339 = vmatprep.subr.mxu0 0.0
    %340 = vmatpush1.msra.mxu0 %v270
    %341 = vmatprep.subr.mxu0 0.0
    %342 = vmatpush1.msra.mxu0 %v271
    %343 = vmatprep.mubr.f32.mxu0 %v157
    %344 = vmatmul.mubr.f32.gmra.mrb[0].mxu0 %v232
    %v345 = vpop.f32.mrb[0].mxu0
    %v346 = vadd.f32 %v277, %v345
    %v347 = vpop.f32.mrb[0].mxu0
    %348 = vmatprep.mubr.f32.mxu0 %v158
    %349 = vmatmul.mubr.f32.gmra.mrb[0].mxu0 %v237
    %v350 = vpop.f32.mrb[0].mxu0
    %v351 = vadd.f32 %v277, %v350
    %v352 = vpop.f32.mrb[0].mxu0
    %353 = vdwg.mxu0
    %v354 = vmax.f32 %v346, 0.0
    %v355 = vmax.f32 %v351, 0.0
    %356 = vmatprep.subr.mxu0 0.0
    %357 = vmatpush1.msra.mxu0 %v354
    %358 = vmatprep.subr.mxu0 0.0
    %359 = vmatpush1.msra.mxu0 %v355
    %360 = vmatprep.subr.mxu0 0.0
    %361 = vmatpush1.msra.mxu0 0.0
    %362 = vmatprep.subr.mxu0 0.0
    %363 = vmatpush1.msra.mxu0 0.0
    %364 = vmatprep.subr.mxu0 0.0
    %365 = vmatpush1.msra.mxu0 0.0
    %366 = vmatprep.subr.mxu0 0.0
    %367 = vmatpush1.msra.mxu0 0.0
    %368 = vmatprep.subr.mxu0 0.0
    %369 = vmatpush1.msra.mxu0 0.0
    %370 = vmatprep.subr.mxu0 0.0
    %371 = vmatpush1.msra.mxu0 0.0
    %372 = vmatprep.subr.mxu0 0.0
    %373 = vmatpush1.msra.mxu0 0.0
    %374 = vmatprep.subr.mxu0 0.0
    %375 = vmatpush1.msra.mxu0 0.0
    %376 = vmatprep.subr.mxu0 0.0
    %377 = vmatpush1.msra.mxu0 0.0
    %378 = vmatprep.subr.mxu0 0.0
    %379 = vmatpush1.msra.mxu0 0.0
    %380 = vmatprep.subr.mxu0 0.0
    %381 = vmatpush1.msra.mxu0 0.0
    %382 = vmatprep.subr.mxu0 0.0
    %383 = vmatpush1.msra.mxu0 0.0
    %384 = vmatprep.subr.mxu0 0.0
    %385 = vmatpush1.msra.mxu0 0.0
    %386 = vmatprep.subr.mxu0 0.0
    %387 = vmatpush1.msra.mxu0 0.0
    %388 = vmatprep.subr.mxu0 0.0
    %389 = vmatpush1.msra.mxu0 0.0
    %390 = vmatprep.subr.mxu0 0.0
    %391 = vmatpush1.msra.mxu0 0.0
    %392 = vmatprep.subr.mxu0 0.0
    %393 = vmatpush1.msra.mxu0 0.0
    %394 = vmatprep.subr.mxu0 0.0
    %395 = vmatpush1.msra.mxu0 0.0
    %396 = vmatprep.subr.mxu0 0.0
    %397 = vmatpush1.msra.mxu0 0.0
    %398 = vmatprep.subr.mxu0 0.0
    %399 = vmatpush1.msra.mxu0 0.0
    %400 = vmatprep.subr.mxu0 0.0
    %401 = vmatpush1.msra.mxu0 0.0
    %402 = vmatprep.subr.mxu0 0.0
    %403 = vmatpush1.msra.mxu0 0.0
    %404 = vmatprep.subr.mxu0 0.0
    %405 = vmatpush1.msra.mxu0 0.0
    %406 = vmatprep.subr.mxu0 0.0
    %407 = vmatpush1.msra.mxu0 0.0
    %408 = vmatprep.subr.mxu0 0.0
    %409 = vmatpush1.msra.mxu0 0.0
    %410 = vmatprep.subr.mxu0 0.0
    %411 = vmatpush1.msra.mxu0 0.0
    %412 = vmatprep.subr.mxu0 0.0
    %413 = vmatpush1.msra.mxu0 0.0
    %414 = vmatprep.subr.mxu0 0.0
    %415 = vmatpush1.msra.mxu0 0.0
    %416 = vmatprep.subr.mxu0 0.0
    %417 = vmatpush1.msra.mxu0 0.0
    %418 = vmatprep.subr.mxu0 0.0
    %419 = vmatpush1.msra.mxu0 0.0
    %420 = vmatprep.mubr.f32.mxu0 0.0
    %421 = vmatmul.mubr.f32.gmra.mrb[0].mxu0 %v160
    %v422 = vpop.f32.mrb[0].mxu0
    %v423 = vadd.f32 0.0, %v422
    %v424 = vpop.f32.mrb[0].mxu0
    %425 = vmatprep.mubr.f32.mxu0 0.0
    %426 = vmatmul.mubr.f32.gmra.mrb[0].mxu0 %v163
    %v427 = vpop.f32.mrb[0].mxu0
    %v428 = vadd.f32 0.0, %v427
    %v429 = vpop.f32.mrb[0].mxu0
    %430 = vdwg.mxu0
    %v431 = vld [vmem:[#allocation7] sm:$0xff]
    %v432 = vld [vmem:[#allocation7 + $0x8] sm:$0xff]
    %v433 = vld [vmem:[#allocation7 + $0x10] sm:$0xff]
    %v434 = vld [vmem:[#allocation7 + $0x18] sm:$0xff]
    %v435 = vld [vmem:[#allocation7 + $0x20] sm:$0xff]
    %v436 = vld [vmem:[#allocation7 + $0x28] sm:$0xff]
    %v437 = vld [vmem:[#allocation7 + $0x30] sm:$0xff]
    %v438 = vld [vmem:[#allocation7 + $0x38] sm:$0xff]
    %v439 = vld [vmem:[#allocation7 + $0x40] sm:$0xff]
    %v440 = vld [vmem:[#allocation7 + $0x48] sm:$0xff]
    %v441 = vld [vmem:[#allocation7 + $0x50] sm:$0xff]
    %v442 = vld [vmem:[#allocation7 + $0x58] sm:$0xff]
    %v443 = vld [vmem:[#allocation7 + $0x60] sm:$0xff]
    %v444 = vld [vmem:[#allocation7 + $0x68] sm:$0xff]
    %v445 = vld [vmem:[#allocation7 + $0x70] sm:$0xff]
    %v446 = vld [vmem:[#allocation7 + $0x78] sm:$0xff]
    %v447 = vld [vmem:[#allocation7 + $0x80] sm:$0xff]
    %v448 = vld [vmem:[#allocation7 + $0x88] sm:$0xff]
    %v449 = vld [vmem:[#allocation7 + $0x90] sm:$0xff]
    %v450 = vld [vmem:[#allocation7 + $0x98] sm:$0xff]
    %v451 = vld [vmem:[#allocation7 + $0xa0] sm:$0xff]
    %v452 = vld [vmem:[#allocation7 + $0xa8] sm:$0xff]
    %v453 = vld [vmem:[#allocation7 + $0xb0] sm:$0xff]
    %v454 = vld [vmem:[#allocation7 + $0xb8] sm:$0xff]
    %v455 = vld [vmem:[#allocation7 + $0xc0] sm:$0xff]
    %v456 = vld [vmem:[#allocation7 + $0xc8] sm:$0xff]
    %v457 = vld [vmem:[#allocation7 + $0xd0] sm:$0xff]
    %v458 = vld [vmem:[#allocation7 + $0xd8] sm:$0xff]
    %v459 = vld [vmem:[#allocation7 + $0xe0] sm:$0xff]
    %v460 = vld [vmem:[#allocation7 + $0xe8] sm:$0xff]
    %v461 = vld [vmem:[#allocation7 + $0xf0] sm:$0xff]
    %v462 = vld [vmem:[#allocation7 + $0xf8] sm:$0xff]
    %v463 = vld [vmem:[%s10] sm:$0x1]
    %v465 = vlaneseq
    %v466 = vshrl.u32 %v465, 7
    %v467 = vsub.s32 0, %v466
    %v468 = vrot.slane %v463, %v467
    %470 = vmatprep.subr.mxu0 0.0
    %471 = vmatpush1.msra.mxu0 %v431
    %472 = vmatprep.subr.mxu0 0.0
    %473 = vmatpush1.msra.mxu0 %v432
    %474 = vmatprep.subr.mxu0 0.0
    %475 = vmatpush1.msra.mxu0 %v433
    %476 = vmatprep.subr.mxu0 0.0
    %477 = vmatpush1.msra.mxu0 %v434
    %478 = vmatprep.subr.mxu0 0.0
    %479 = vmatpush1.msra.mxu0 %v435
    %480 = vmatprep.subr.mxu0 0.0
    %481 = vmatpush1.msra.mxu0 %v436
    %482 = vmatprep.subr.mxu0 0.0
    %483 = vmatpush1.msra.mxu0 %v437
    %484 = vmatprep.subr.mxu0 0.0
    %485 = vmatpush1.msra.mxu0 %v438
    %486 = vmatprep.subr.mxu0 0.0
    %487 = vmatpush1.msra.mxu0 %v439
    %488 = vmatprep.subr.mxu0 0.0
    %489 = vmatpush1.msra.mxu0 %v440
    %490 = vmatprep.subr.mxu0 0.0
    %491 = vmatpush1.msra.mxu0 %v441
    %492 = vmatprep.subr.mxu0 0.0
    %493 = vmatpush1.msra.mxu0 %v442
    %494 = vmatprep.subr.mxu0 0.0
    %495 = vmatpush1.msra.mxu0 %v443
    %496 = vmatprep.subr.mxu0 0.0
    %497 = vmatpush1.msra.mxu0 %v444
    %498 = vmatprep.subr.mxu0 0.0
    %499 = vmatpush1.msra.mxu0 %v445
    %500 = vmatprep.subr.mxu0 0.0
    %501 = vmatpush1.msra.mxu0 %v446
    %502 = vmatprep.subr.mxu0 0.0
    %503 = vmatpush1.msra.mxu0 %v447
    %504 = vmatprep.subr.mxu0 0.0
    %505 = vmatpush1.msra.mxu0 %v448
    %506 = vmatprep.subr.mxu0 0.0
    %507 = vmatpush1.msra.mxu0 %v449
    %508 = vmatprep.subr.mxu0 0.0
    %509 = vmatpush1.msra.mxu0 %v450
    %510 = vmatprep.subr.mxu0 0.0
    %511 = vmatpush1.msra.mxu0 %v451
    %512 = vmatprep.subr.mxu0 0.0
    %513 = vmatpush1.msra.mxu0 %v452
    %514 = vmatprep.subr.mxu0 0.0
    %515 = vmatpush1.msra.mxu0 %v453
    %516 = vmatprep.subr.mxu0 0.0
    %517 = vmatpush1.msra.mxu0 %v454
    %518 = vmatprep.subr.mxu0 0.0
    %519 = vmatpush1.msra.mxu0 %v455
    %520 = vmatprep.subr.mxu0 0.0
    %521 = vmatpush1.msra.mxu0 %v456
    %522 = vmatprep.subr.mxu0 0.0
    %523 = vmatpush1.msra.mxu0 %v457
    %524 = vmatprep.subr.mxu0 0.0
    %525 = vmatpush1.msra.mxu0 %v458
    %526 = vmatprep.subr.mxu0 0.0
    %527 = vmatpush1.msra.mxu0 %v459
    %528 = vmatprep.subr.mxu0 0.0
    %529 = vmatpush1.msra.mxu0 %v460
    %530 = vmatprep.subr.mxu0 0.0
    %531 = vmatpush1.msra.mxu0 %v461
    %532 = vmatprep.subr.mxu0 0.0
    %533 = vmatpush1.msra.mxu0 %v462
    %534 = vmatprep.mubr.f32.mxu0 %v354
    %535 = vmatmul.mubr.f32.gmra.mrb[0].mxu0 %v423
    %v536 = vpop.f32.mrb[0].mxu0
    %v537 = vadd.f32 %v468, %v536
    %v538 = vpop.f32.mrb[0].mxu0
    %539 = vmatprep.mubr.f32.mxu0 %v355
    %540 = vmatmul.mubr.f32.gmra.mrb[0].mxu0 %v428
    %v541 = vpop.f32.mrb[0].mxu0
    %v542 = vadd.f32 %v468, %v541
    %v543 = vpop.f32.mrb[0].mxu0
    %544 = vdwg.mxu0
    %v545 = vld [vmem:[%s3] sm:$0xff]
    %v547 = vsel %vm109, %v545, 0
    %549 = vmatprep.subr.mxu0 0.0
    %550 = vmatpush1.msra.mxu0 %v537
    %551 = vmatprep.subr.mxu0 0.0
    %552 = vmatpush1.msra.mxu0 %v542
    %553 = vmatprep.subr.mxu0 0.0
    %554 = vmatpush1.msra.mxu0 0.0
    %555 = vmatprep.subr.mxu0 0.0
    %556 = vmatpush1.msra.mxu0 0.0
    %557 = vmatprep.subr.mxu0 0.0
    %558 = vmatpush1.msra.mxu0 0.0
    %559 = vmatprep.subr.mxu0 0.0
    %560 = vmatpush1.msra.mxu0 0.0
    %561 = vmatprep.subr.mxu0 0.0
    %562 = vmatpush1.msra.mxu0 0.0
    %563 = vmatprep.subr.mxu0 0.0
    %564 = vmatpush1.msra.mxu0 0.0
    %565 = vmatprep.subr.mxu0 0.0
    %566 = vmatpush1.msra.mxu0 0.0
    %567 = vmatprep.subr.mxu0 0.0
    %568 = vmatpush1.msra.mxu0 0.0
    %569 = vmatprep.subr.mxu0 0.0
    %570 = vmatpush1.msra.mxu0 0.0
    %571 = vmatprep.subr.mxu0 0.0
    %572 = vmatpush1.msra.mxu0 0.0
    %573 = vmatprep.subr.mxu0 0.0
    %574 = vmatpush1.msra.mxu0 0.0
    %575 = vmatprep.subr.mxu0 0.0
    %576 = vmatpush1.msra.mxu0 0.0
    %577 = vmatprep.subr.mxu0 0.0
    %578 = vmatpush1.msra.mxu0 0.0
    %579 = vmatprep.subr.mxu0 0.0
    %580 = vmatpush1.msra.mxu0 0.0
    %581 = vmatprep.subr.mxu0 0.0
    %582 = vmatpush1.msra.mxu0 0.0
    %583 = vmatprep.subr.mxu0 0.0
    %584 = vmatpush1.msra.mxu0 0.0
    %585 = vmatprep.subr.mxu0 0.0
    %586 = vmatpush1.msra.mxu0 0.0
    %587 = vmatprep.subr.mxu0 0.0
    %588 = vmatpush1.msra.mxu0 0.0
    %589 = vmatprep.subr.mxu0 0.0
    %590 = vmatpush1.msra.mxu0 0.0
    %591 = vmatprep.subr.mxu0 0.0
    %592 = vmatpush1.msra.mxu0 0.0
    %593 = vmatprep.subr.mxu0 0.0
    %594 = vmatpush1.msra.mxu0 0.0
    %595 = vmatprep.subr.mxu0 0.0
    %596 = vmatpush1.msra.mxu0 0.0
    %597 = vmatprep.subr.mxu0 0.0
    %598 = vmatpush1.msra.mxu0 0.0
    %599 = vmatprep.subr.mxu0 0.0
    %600 = vmatpush1.msra.mxu0 0.0
    %601 = vmatprep.subr.mxu0 0.0
    %602 = vmatpush1.msra.mxu0 0.0
    %603 = vmatprep.subr.mxu0 0.0
    %604 = vmatpush1.msra.mxu0 0.0
    %605 = vmatprep.subr.mxu0 0.0
    %606 = vmatpush1.msra.mxu0 0.0
    %607 = vmatprep.subr.mxu0 0.0
    %608 = vmatpush1.msra.mxu0 0.0
    %609 = vmatprep.subr.mxu0 0.0
    %610 = vmatpush1.msra.mxu0 0.0
    %611 = vmatprep.subr.mxu0 0.0
    %612 = vmatpush1.msra.mxu0 0.0
    %613 = vmatprep.mubr.f32.mxu0 0.0
    %614 = vmatmul.mubr.f32.gmra.mrb[0].mxu0 %v547
    %v615 = vpop.f32.mrb[0].mxu0
    %v616 = vadd.f32 0.0, %v615
    %v617 = vpop.f32.mrb[0].mxu0
    %618 = vdwg.mxu0
    %v619 = vld [vmem:[#allocation8] sm:$0xff]
    %v620 = vld [vmem:[#allocation8 + $0x8] sm:$0xff]
    %v621 = vld [vmem:[#allocation8 + $0x10] sm:$0xff]
    %v622 = vld [vmem:[#allocation8 + $0x18] sm:$0xff]
    %v623 = vld [vmem:[#allocation8 + $0x20] sm:$0xff]
    %v624 = vld [vmem:[#allocation8 + $0x28] sm:$0xff]
    %v625 = vld [vmem:[#allocation8 + $0x30] sm:$0xff]
    %v626 = vld [vmem:[#allocation8 + $0x38] sm:$0xff]
    %v627 = vld [vmem:[#allocation8 + $0x40] sm:$0xff]
    %v628 = vld [vmem:[#allocation8 + $0x48] sm:$0xff]
    %v629 = vld [vmem:[#allocation8 + $0x50] sm:$0xff]
    %v630 = vld [vmem:[#allocation8 + $0x58] sm:$0xff]
    %v631 = vld [vmem:[#allocation8 + $0x60] sm:$0xff]
    %v632 = vld [vmem:[#allocation8 + $0x68] sm:$0xff]
    %v633 = vld [vmem:[#allocation8 + $0x70] sm:$0xff]
    %v634 = vld [vmem:[#allocation8 + $0x78] sm:$0xff]
    %v635 = vld [vmem:[%s12] sm:$0x1]
    %v637 = vlaneseq
    %v638 = vshrl.u32 %v637, 7
    %v639 = vsub.s32 0, %v638
    %v640 = vrot.slane %v635, %v639
    %642 = vmatprep.subr.mxu0 0.0
    %643 = vmatpush1.msra.mxu0 %v619
    %644 = vmatprep.subr.mxu0 0.0
    %645 = vmatpush1.msra.mxu0 %v620
    %646 = vmatprep.subr.mxu0 0.0
    %647 = vmatpush1.msra.mxu0 %v621
    %648 = vmatprep.subr.mxu0 0.0
    %649 = vmatpush1.msra.mxu0 %v622
    %650 = vmatprep.subr.mxu0 0.0
    %651 = vmatpush1.msra.mxu0 %v623
    %652 = vmatprep.subr.mxu0 0.0
    %653 = vmatpush1.msra.mxu0 %v624
    %654 = vmatprep.subr.mxu0 0.0
    %655 = vmatpush1.msra.mxu0 %v625
    %656 = vmatprep.subr.mxu0 0.0
    %657 = vmatpush1.msra.mxu0 %v626
    %658 = vmatprep.subr.mxu0 0.0
    %659 = vmatpush1.msra.mxu0 %v627
    %660 = vmatprep.subr.mxu0 0.0
    %661 = vmatpush1.msra.mxu0 %v628
    %662 = vmatprep.subr.mxu0 0.0
    %663 = vmatpush1.msra.mxu0 %v629
    %664 = vmatprep.subr.mxu0 0.0
    %665 = vmatpush1.msra.mxu0 %v630
    %666 = vmatprep.subr.mxu0 0.0
    %667 = vmatpush1.msra.mxu0 %v631
    %668 = vmatprep.subr.mxu0 0.0
    %669 = vmatpush1.msra.mxu0 %v632
    %670 = vmatprep.subr.mxu0 0.0
    %671 = vmatpush1.msra.mxu0 %v633
    %672 = vmatprep.subr.mxu0 0.0
    %673 = vmatpush1.msra.mxu0 %v634
    %674 = vmatprep.subr.mxu0 0.0
    %675 = vmatpush1.msra.mxu0 0.0
    %676 = vmatprep.subr.mxu0 0.0
    %677 = vmatpush1.msra.mxu0 0.0
    %678 = vmatprep.subr.mxu0 0.0
    %679 = vmatpush1.msra.mxu0 0.0
    %680 = vmatprep.subr.mxu0 0.0
    %681 = vmatpush1.msra.mxu0 0.0
    %682 = vmatprep.subr.mxu0 0.0
    %683 = vmatpush1.msra.mxu0 0.0
    %684 = vmatprep.subr.mxu0 0.0
    %685 = vmatpush1.msra.mxu0 0.0
    %686 = vmatprep.subr.mxu0 0.0
    %687 = vmatpush1.msra.mxu0 0.0
    %688 = vmatprep.subr.mxu0 0.0
    %689 = vmatpush1.msra.mxu0 0.0
    %690 = vmatprep.subr.mxu0 0.0
    %691 = vmatpush1.msra.mxu0 0.0
    %692 = vmatprep.subr.mxu0 0.0
    %693 = vmatpush1.msra.mxu0 0.0
    %694 = vmatprep.subr.mxu0 0.0
    %695 = vmatpush1.msra.mxu0 0.0
    %696 = vmatprep.subr.mxu0 0.0
    %697 = vmatpush1.msra.mxu0 0.0
    %698 = vmatprep.subr.mxu0 0.0
    %699 = vmatpush1.msra.mxu0 0.0
    %700 = vmatprep.subr.mxu0 0.0
    %701 = vmatpush1.msra.mxu0 0.0
    %702 = vmatprep.subr.mxu0 0.0
    %703 = vmatpush1.msra.mxu0 0.0
    %704 = vmatprep.subr.mxu0 0.0
    %705 = vmatpush1.msra.mxu0 0.0
    %706 = vmatprep.mubr.f32.mxu0 0.0
    %707 = vmatmul.mubr.f32.gmra.mrb[0].mxu0 %v616
    %v708 = vpop.f32.mrb[0].mxu0
    %v709 = vadd.f32 %v640, %v708
    %v710 = vpop.f32.mrb[0].mxu0
    %711 = vdwg.mxu0
    %712 = vst [vmem:[#allocation10] sm:$0xff] %v709
    // Predicated region
    $region70: #{tpu_custom_call.1} parent=1 // pred_check
      _
    $region71: #{tpu_custom_call.1} parent=1 // pred_check_branch
      %714 = sbr.rel (0) target = $region73
    $region72: #{tpu_custom_call.1} parent=1 // pred_region
      %s716 = ssub.s32 128, 128
      %717 = vsyncadd [#allocation4], %s716
      %s719 = sshll.u32 [#allocation10], 4
      %s720 = int_to_ptr.vmem [resolvable:$true] %s719
      %722 = dma.vmem_to_hbm [thread:$0]  %s720, 128, %s13, [#allocation4]
    $region73: #{tpu_custom_call.1} parent=1 // pred_fallthru
      _
    // Predicated region
    $region74: #{tpu_custom_call.1} parent=1 // pred_check
      _
    $region75: #{tpu_custom_call.1} parent=1 // pred_check_branch
      %724 = sbr.rel (0) target = $region77
    $region76: #{tpu_custom_call.1} parent=1 // pred_region
      %725 = dma.done [#allocation4], 128
    $region77: #{tpu_custom_call.1} parent=1 // pred_fallthru
      _
    %726 = vsyncpa [#allocation3], 1
    %727 = vsyncpa [#allocation6], 1
    %728 = vsyncpa [#allocation9], 1
    %729 = vsyncpa [#allocation4], 1

</llo_original>
